<compile_context>
chip_gen: v6e
topology: v6e:2x2x1
jax: 0.10.0
libtpu: 0.0.40
codegen_flags: <defaults>
</compile_context>

<pallas_src>
import jax
import jax.numpy as jnp
from jax.experimental import pallas as pl
from jax.experimental.pallas import tpu as pltpu

NEG_SLOPE = 0.1  # cnn.LeakyReLU(negative_slope=0.1)


def _round_up(x, m):
    return ((x + m - 1) // m) * m


def _leaky(x):
    return jnp.where(x >= 0, x, NEG_SLOPE * x)


def _choose_tm(m, max_tm=512):
    """Row tile: multiple of 8, as large as reasonable, prefer grid >= 2."""
    tm = min(max_tm, _round_up(m, 8))
    tm = _round_up(tm, 8)
    # Prefer at least 2 grid steps so v7x's two TensorCores both get work.
    if _round_up(m, tm) // tm < 2 and tm >= 16:
        tm = _round_up(tm // 2, 8)
    return tm


# ---------------------------------------------------------------------------
# Kernel 1: 3-layer complex MLP, fused real/imag block matmuls.
#   a_ref : (tm, Fi_p)  bf16, columns = [xr | xi | 0-pad]
#   wK    : (Kin_p, Kout_p) bf16 block weights [[wr, wi], [-wi, wr]] (0-padded)
#   bK    : (1, Kout_p) f32 fused bias [br | bi | 0-pad]
#   o_ref : (tm, Fo_p)  f32, columns = [yr | yi | 0-pad]
# ---------------------------------------------------------------------------
def _complex_mlp_kernel(a_ref, w1_ref, b1_ref, w2_ref, b2_ref, w3_ref, b3_ref,
                        o_ref):
    a = a_ref[...]                                            # bf16
    h = jnp.dot(a, w1_ref[...], preferred_element_type=jnp.float32)
    h = _leaky(h + b1_ref[...])
    h = jnp.dot(h.astype(jnp.bfloat16), w2_ref[...],
                preferred_element_type=jnp.float32)
    h = _leaky(h + b2_ref[...])
    y = jnp.dot(h.astype(jnp.bfloat16), w3_ref[...],
                preferred_element_type=jnp.float32)
    o_ref[...] = y + b3_ref[...]


def complex_mlp(xr, xi, packed, max_tm=512):
    """xr, xi: (M, F) float32. Returns (yr, yi): (M, F) float32."""
    M, F = xr.shape
    Fi_p = packed["w1"].shape[0]
    Fo_p = packed["w3"].shape[1]

    tm = _choose_tm(M, max_tm)
    Mpad = _round_up(M, tm)

    # Fused, lane-padded activation block [xr | xi | zeros], bf16 for the MXU.
    a = jnp.concatenate([xr, xi], axis=-1)                    # (M, 2F)
    a = jnp.pad(a, ((0, Mpad - M), (0, Fi_p - 2 * F)))
    a = a.astype(jnp.bfloat16)

    row_in_spec = pl.BlockSpec((tm, Fi_p), lambda i: (i, 0))
    row_out_spec = pl.BlockSpec((tm, Fo_p), lambda i: (i, 0))

    weight_args = [packed["w1"], packed["b1"],
                   packed["w2"], packed["b2"],
                   packed["w3"], packed["b3"]]
    in_specs = [row_in_spec] + [
        pl.BlockSpec(w.shape, lambda i: (0, 0)) for w in weight_args
    ]

    # NOTE: for large in_features (e.g. W >= 256 MRI) raise vmem_limit_bytes
    # and re-budget tm; on v7x budget against 64 MiB physical VMEM.
    y = pl.pallas_call(
        _complex_mlp_kernel,
        out_shape=jax.ShapeDtypeStruct((Mpad, Fo_p), jnp.float32),
        grid_spec=pltpu.PrefetchScalarGridSpec(
            num_scalar_prefetch=0,
            grid=(Mpad // tm,),
            in_specs=in_specs,
            out_specs=row_out_spec,
        ),
        compiler_params=pltpu.CompilerParams(
            dimension_semantics=("parallel",)),
    )(a, *weight_args)

    yr = y[:M, :F]
    yi = y[:M, F:2 * F]
    return yr, yi


# ---------------------------------------------------------------------------
# Kernel 2: k-space data consistency on lane-dense planes.
# mask = (ksp_in != 0) (complex nonzero); output = mask ? ksp_in : ksp_pred.
# ---------------------------------------------------------------------------
def _dc_kernel(kr_ref, ki_ref, pr_ref, pi_ref, or_ref, oi_ref):
    kr = kr_ref[...]
    ki = ki_ref[...]
    mask = (kr != 0.0) | (ki != 0.0)
    or_ref[...] = jnp.where(mask, kr, pr_ref[...])
    oi_ref[...] = jnp.where(mask, ki, pi_ref[...])


def apply_dc(kr, ki, pr, pi, lane=512, max_rows=256):
    """Inputs are flat 1-D float32 planes of equal length; returns same."""
    n = kr.shape[0]
    rows = -(-n // lane)                         # cdiv
    trow = min(max_rows, _round_up(rows, 8))     # multiple of 8
    rows_pad = _round_up(rows, trow)
    n_pad = rows_pad * lane

    def prep(a):
        return jnp.pad(a, (0, n_pad - n)).reshape(rows_pad, lane)

    KR, KI, PR, PI = (prep(a) for a in (kr, ki, pr, pi))

    spec = pl.BlockSpec((trow, lane), lambda i: (i, 0))
    out_shape = (jax.ShapeDtypeStruct((rows_pad, lane), jnp.float32),
                 jax.ShapeDtypeStruct((rows_pad, lane), jnp.float32))

    dr, di = pl.pallas_call(
        _dc_kernel,
        out_shape=out_shape,
        grid_spec=pltpu.PrefetchScalarGridSpec(
            num_scalar_prefetch=0,
            grid=(rows_pad // trow,),
            in_specs=[spec] * 4,
            out_specs=[spec, spec],
        ),
        compiler_params=pltpu.CompilerParams(
            dimension_semantics=("parallel",)),
    )(KR, KI, PR, PI)

    return dr.reshape(-1)[:n], di.reshape(-1)[:n]


# ---------------------------------------------------------------------------
# Parameter init (deterministic, synthetic): complex Linear layers matching
# nn.Linear(in, out), weights stored pre-transposed (in, out) so x @ W.
# ---------------------------------------------------------------------------
def init_params(in_features, key):
    hidden = 2 * in_features
    keys = jax.random.split(key, 12)

    def lin(kw_r, kw_i, kb_r, kb_i, fan_in, fan_out):
        bound = 1.0 / jnp.sqrt(jnp.float32(fan_in))
        wr = jax.random.uniform(kw_r, (fan_in, fan_out), jnp.float32,
                                -bound, bound)
        wi = jax.random.uniform(kw_i, (fan_in, fan_out), jnp.float32,
                                -bound, bound)
        br = jax.random.uniform(kb_r, (1, fan_out), jnp.float32, -bound, bound)
        bi = jax.random.uniform(kb_i, (1, fan_out), jnp.float32, -bound, bound)
        return wr, wi, br, bi

    w1r, w1i, b1r, b1i = lin(*keys[0:4], in_features, hidden)
    w2r, w2i, b2r, b2i = lin(*keys[4:8], hidden, hidden)
    w3r, w3i, b3r, b3i = lin(*keys[8:12], hidden, in_features)
    return dict(w1r=w1r, w1i=w1i, b1r=b1r, b1i=b1i,
                w2r=w2r, w2i=w2i, b2r=b2r, b2i=b2i,
                w3r=w3r, w3i=w3i, b3r=b3r, b3i=b3i)


def pack_params(params, in_features):
    """Build fused block weights [[wr, wi], [-wi, wr]] and fused biases,
    zero-padded so every fused dim is a multiple of 128 (lane-dense).
    The -wi sign is applied here, once, at packing time."""
    F = in_features
    H = 2 * F
    Fi, Fh, Fo = 2 * F, 2 * H, 2 * F
    Fi_p, Fh_p, Fo_p = (_round_up(d, 128) for d in (Fi, Fh, Fo))

    def blk(wr, wi):
        top = jnp.concatenate([wr, wi], axis=1)
        bot = jnp.concatenate([-wi, wr], axis=1)
        return jnp.concatenate([top, bot], axis=0)   # (2*fan_in, 2*fan_out)

    def pad2(w, kpad, npad):
        k, n = w.shape
        return jnp.pad(w, ((0, kpad - k), (0, npad - n)))

    def fuse_b(br, bi, npad):
        b = jnp.concatenate([br, bi], axis=1)
        return jnp.pad(b, ((0, 0), (0, npad - b.shape[1])))

    w1 = pad2(blk(params["w1r"], params["w1i"]), Fi_p, Fh_p).astype(jnp.bfloat16)
    w2 = pad2(blk(params["w2r"], params["w2i"]), Fh_p, Fh_p).astype(jnp.bfloat16)
    w3 = pad2(blk(params["w3r"], params["w3i"]), Fh_p, Fo_p).astype(jnp.bfloat16)
    b1 = fuse_b(params["b1r"], params["b1i"], Fh_p)
    b2 = fuse_b(params["b2r"], params["b2i"], Fh_p)
    b3 = fuse_b(params["b3r"], params["b3i"], Fo_p)
    return dict(w1=w1, b1=b1, w2=w2, b2=b2, w3=w3, b3=b3)


# ---------------------------------------------------------------------------
# Full PAFT_DC forward.
# ---------------------------------------------------------------------------
@jax.jit
def paft_dc_forward(ksp_in, packed):
    B, C, H, W = ksp_in.shape

    # x = ifftn(ksp_in, dim=-2)
    x = jnp.fft.ifft(ksp_in, axis=-2)

    xr = jnp.real(x).astype(jnp.float32).reshape(-1, W)
    xi = jnp.imag(x).astype(jnp.float32).reshape(-1, W)

    # isp_pred = fc(x)   (complex 3-layer MLP, fused Pallas kernel)
    yr, yi = complex_mlp(xr, xi, packed)
    isp_pred = jax.lax.complex(yr, yi).reshape(B, C, H, W)

    # ksp_pred = fftn(isp_pred, dim=(-2, -1))
    ksp_pred = jnp.fft.fftn(isp_pred, axes=(-2, -1))

    # data consistency (Pallas kernel, lane-dense flat planes)
    kr = jnp.real(ksp_in).astype(jnp.float32).reshape(-1)
    ki = jnp.imag(ksp_in).astype(jnp.float32).reshape(-1)
    pr = jnp.real(ksp_pred).astype(jnp.float32).reshape(-1)
    pi = jnp.imag(ksp_pred).astype(jnp.float32).reshape(-1)
    dr, di = apply_dc(kr, ki, pr, pi)
    ksp_dc = jax.lax.complex(dr, di).reshape(B, C, H, W)

    # isp_pred = ifftn(ksp_dc, dim=(-2, -1))
    return jnp.fft.ifftn(ksp_dc, axes=(-2, -1))


if __name__ == "__main__":
    key = jax.random.PRNGKey(0)
    k_in, k_param, k_mask = jax.random.split(key, 3)

    B, C, H, W = 2, 4, 16, 16          # in_features == W == 16
    in_features = W

    kr = jax.random.normal(jax.random.fold_in(k_in, 0), (B, C, H, W),
                           jnp.float32)
    ki = jax.random.normal(jax.random.fold_in(k_in, 1), (B, C, H, W),
                           jnp.float32)
    # simulate undersampling: zero out some k-space lines so the DC mask is
    # non-trivial
    line_mask = (jax.random.uniform(k_mask, (1, 1, H, 1)) > 0.5)
    ksp_in = jax.lax.complex(kr, ki) * line_mask.astype(jnp.complex64)

    params = init_params(in_features, k_param)
    packed = pack_params(params, in_features)

    out = paft_dc_forward(ksp_in, packed)
    out = jax.block_until_ready(out)

    assert out.shape == (B, C, H, W)
    assert jnp.iscomplexobj(out)
    print("KERNEL_OK")
</pallas_src>

<mosaic_0001>
module attributes {stable_mosaic.version = 11 : i64} {
  func.func @_complex_mlp_kernel(%arg0: i32, %arg1: memref<64x128xbf16, #tpu.memory_space<vmem>>, %arg2: memref<128x128xbf16, #tpu.memory_space<vmem>>, %arg3: memref<1x128xf32, #tpu.memory_space<vmem>>, %arg4: memref<128x128xbf16, #tpu.memory_space<vmem>>, %arg5: memref<1x128xf32, #tpu.memory_space<vmem>>, %arg6: memref<128x128xbf16, #tpu.memory_space<vmem>>, %arg7: memref<1x128xf32, #tpu.memory_space<vmem>>, %arg8: memref<64x128xf32, #tpu.memory_space<vmem>>) attributes {dimension_semantics = [#tpu.dimension_semantics<parallel>], iteration_bounds = array<i64: 2>, scalar_prefetch = 0 : i64, scratch_operands = 0 : i64, tpu.core_type = #tpu.core_type<tc>, window_params = [{transform_indices = @transform_0, window_bounds = array<i64: 64, 128>}, {pipeline_mode = #tpu.pipeline_mode<synchronous>, transform_indices = @transform_1, window_bounds = array<i64: 128, 128>}, {pipeline_mode = #tpu.pipeline_mode<synchronous>, transform_indices = @transform_2, window_bounds = array<i64: 1, 128>}, {pipeline_mode = #tpu.pipeline_mode<synchronous>, transform_indices = @transform_3, window_bounds = array<i64: 128, 128>}, {pipeline_mode = #tpu.pipeline_mode<synchronous>, transform_indices = @transform_4, window_bounds = array<i64: 1, 128>}, {pipeline_mode = #tpu.pipeline_mode<synchronous>, transform_indices = @transform_5, window_bounds = array<i64: 128, 128>}, {pipeline_mode = #tpu.pipeline_mode<synchronous>, transform_indices = @transform_6, window_bounds = array<i64: 1, 128>}, {transform_indices = @transform_7, window_bounds = array<i64: 64, 128>}]} {
    %c0 = arith.constant 0 : index
    %c0_0 = arith.constant 0 : index
    %0 = vector.load %arg1[%c0, %c0_0] : memref<64x128xbf16, #tpu.memory_space<vmem>>, vector<64x128xbf16>
    %c0_1 = arith.constant 0 : index
    %c0_2 = arith.constant 0 : index
    %1 = vector.load %arg2[%c0_1, %c0_2] : memref<128x128xbf16, #tpu.memory_space<vmem>>, vector<128x128xbf16>
    %cst = arith.constant dense<0.000000e+00> : vector<64x128xf32>
    %2 = tpu.matmul %0, %1, %cst {dimension_numbers = #tpu.dot_dimension_numbers<[1], [0], [0], [1], [0, 0, 1, 1], [], []>} : vector<64x128xbf16>, vector<128x128xbf16>, vector<64x128xf32> -> vector<64x128xf32>
    %c0_3 = arith.constant 0 : index
    %c0_4 = arith.constant 0 : index
    %3 = vector.load %arg3[%c0_3, %c0_4] : memref<1x128xf32, #tpu.memory_space<vmem>>, vector<1x128xf32>
    %4 = vector.broadcast %3 : vector<1x128xf32> to vector<64x128xf32>
    %5 = arith.addf %2, %4 : vector<64x128xf32>
    %cst_5 = arith.constant 0.000000e+00 : f32
    %6 = vector.broadcast %cst_5 : f32 to vector<64x128xf32>
    %7 = arith.cmpf oge, %5, %6 : vector<64x128xf32>
    %cst_6 = arith.constant 1.000000e-01 : f32
    %8 = vector.broadcast %cst_6 : f32 to vector<64x128xf32>
    %9 = arith.mulf %8, %5 : vector<64x128xf32>
    %10 = arith.select %7, %5, %9 : vector<64x128xi1>, vector<64x128xf32>
    %11 = arith.truncf %10 : vector<64x128xf32> to vector<64x128xbf16>
    %c0_7 = arith.constant 0 : index
    %c0_8 = arith.constant 0 : index
    %12 = vector.load %arg4[%c0_7, %c0_8] : memref<128x128xbf16, #tpu.memory_space<vmem>>, vector<128x128xbf16>
    %cst_9 = arith.constant dense<0.000000e+00> : vector<64x128xf32>
    %13 = tpu.matmul %11, %12, %cst_9 {dimension_numbers = #tpu.dot_dimension_numbers<[1], [0], [0], [1], [0, 0, 1, 1], [], []>} : vector<64x128xbf16>, vector<128x128xbf16>, vector<64x128xf32> -> vector<64x128xf32>
    %c0_10 = arith.constant 0 : index
    %c0_11 = arith.constant 0 : index
    %14 = vector.load %arg5[%c0_10, %c0_11] : memref<1x128xf32, #tpu.memory_space<vmem>>, vector<1x128xf32>
    %15 = vector.broadcast %14 : vector<1x128xf32> to vector<64x128xf32>
    %16 = arith.addf %13, %15 : vector<64x128xf32>
    %cst_12 = arith.constant 0.000000e+00 : f32
    %17 = vector.broadcast %cst_12 : f32 to vector<64x128xf32>
    %18 = arith.cmpf oge, %16, %17 : vector<64x128xf32>
    %cst_13 = arith.constant 1.000000e-01 : f32
    %19 = vector.broadcast %cst_13 : f32 to vector<64x128xf32>
    %20 = arith.mulf %19, %16 : vector<64x128xf32>
    %21 = arith.select %18, %16, %20 : vector<64x128xi1>, vector<64x128xf32>
    %22 = arith.truncf %21 : vector<64x128xf32> to vector<64x128xbf16>
    %c0_14 = arith.constant 0 : index
    %c0_15 = arith.constant 0 : index
    %23 = vector.load %arg6[%c0_14, %c0_15] : memref<128x128xbf16, #tpu.memory_space<vmem>>, vector<128x128xbf16>
    %cst_16 = arith.constant dense<0.000000e+00> : vector<64x128xf32>
    %24 = tpu.matmul %22, %23, %cst_16 {dimension_numbers = #tpu.dot_dimension_numbers<[1], [0], [0], [1], [0, 0, 1, 1], [], []>} : vector<64x128xbf16>, vector<128x128xbf16>, vector<64x128xf32> -> vector<64x128xf32>
    %c0_17 = arith.constant 0 : index
    %c0_18 = arith.constant 0 : index
    %25 = vector.load %arg7[%c0_17, %c0_18] : memref<1x128xf32, #tpu.memory_space<vmem>>, vector<1x128xf32>
    %26 = vector.broadcast %25 : vector<1x128xf32> to vector<64x128xf32>
    %27 = arith.addf %24, %26 : vector<64x128xf32>
    %c0_19 = arith.constant 0 : index
    %c0_20 = arith.constant 0 : index
    %28 = vector.load %arg8[%c0_19, %c0_20] : memref<64x128xf32, #tpu.memory_space<vmem>>, vector<64x128xf32>
    tpu.vector_store %arg8[%c0_19, %c0_20], %27 {strides = array<i32>} : memref<64x128xf32, #tpu.memory_space<vmem>>, vector<64x128xf32>,
    return
  }
  func.func @transform_0(%arg0: i32) -> (i32, i32) {
    %c0_i32 = arith.constant 0 : i32
    %c0_i32_0 = arith.constant 0 : i32
    return %arg0, %c0_i32 : i32, i32
  }
  func.func @transform_1(%arg0: i32) -> (i32, i32) {
    %c0_i32 = arith.constant 0 : i32
    %c0_i32_0 = arith.constant 0 : i32
    %c0_i32_1 = arith.constant 0 : i32
    return %c0_i32, %c0_i32_0 : i32, i32
  }
  func.func @transform_2(%arg0: i32) -> (i32, i32) {
    %c0_i32 = arith.constant 0 : i32
    %c0_i32_0 = arith.constant 0 : i32
    %c0_i32_1 = arith.constant 0 : i32
    return %c0_i32, %c0_i32_0 : i32, i32
  }
  func.func @transform_3(%arg0: i32) -> (i32, i32) {
    %c0_i32 = arith.constant 0 : i32
    %c0_i32_0 = arith.constant 0 : i32
    %c0_i32_1 = arith.constant 0 : i32
    return %c0_i32, %c0_i32_0 : i32, i32
  }
  func.func @transform_4(%arg0: i32) -> (i32, i32) {
    %c0_i32 = arith.constant 0 : i32
    %c0_i32_0 = arith.constant 0 : i32
    %c0_i32_1 = arith.constant 0 : i32
    return %c0_i32, %c0_i32_0 : i32, i32
  }
  func.func @transform_5(%arg0: i32) -> (i32, i32) {
    %c0_i32 = arith.constant 0 : i32
    %c0_i32_0 = arith.constant 0 : i32
    %c0_i32_1 = arith.constant 0 : i32
    return %c0_i32, %c0_i32_0 : i32, i32
  }
  func.func @transform_6(%arg0: i32) -> (i32, i32) {
    %c0_i32 = arith.constant 0 : i32
    %c0_i32_0 = arith.constant 0 : i32
    %c0_i32_1 = arith.constant 0 : i32
    return %c0_i32, %c0_i32_0 : i32, i32
  }
  func.func @transform_7(%arg0: i32) -> (i32, i32) {
    %c0_i32 = arith.constant 0 : i32
    %c0_i32_0 = arith.constant 0 : i32
    return %arg0, %c0_i32 : i32, i32
  }
}

module attributes {stable_mosaic.version = 11 : i64} {
  func.func @_dc_kernel(%arg0: i32, %arg1: memref<8x512xf32, #tpu.memory_space<vmem>>, %arg2: memref<8x512xf32, #tpu.memory_space<vmem>>, %arg3: memref<8x512xf32, #tpu.memory_space<vmem>>, %arg4: memref<8x512xf32, #tpu.memory_space<vmem>>, %arg5: memref<8x512xf32, #tpu.memory_space<vmem>>, %arg6: memref<8x512xf32, #tpu.memory_space<vmem>>) attributes {dimension_semantics = [#tpu.dimension_semantics<parallel>], iteration_bounds = array<i64: 1>, scalar_prefetch = 0 : i64, scratch_operands = 0 : i64, tpu.core_type = #tpu.core_type<tc>, window_params = [{transform_indices = @transform_0, window_bounds = array<i64: 8, 512>}, {transform_indices = @transform_1, window_bounds = array<i64: 8, 512>}, {transform_indices = @transform_2, window_bounds = array<i64: 8, 512>}, {transform_indices = @transform_3, window_bounds = array<i64: 8, 512>}, {transform_indices = @transform_4, window_bounds = array<i64: 8, 512>}, {transform_indices = @transform_5, window_bounds = array<i64: 8, 512>}]} {
    %c0 = arith.constant 0 : index
    %c0_0 = arith.constant 0 : index
    %0 = vector.load %arg1[%c0, %c0_0] : memref<8x512xf32, #tpu.memory_space<vmem>>, vector<8x512xf32>
    %c0_1 = arith.constant 0 : index
    %c0_2 = arith.constant 0 : index
    %1 = vector.load %arg2[%c0_1, %c0_2] : memref<8x512xf32, #tpu.memory_space<vmem>>, vector<8x512xf32>
    %cst = arith.constant 0.000000e+00 : f32
    %2 = vector.broadcast %cst : f32 to vector<8x512xf32>
    %3 = arith.cmpf one, %0, %2 : vector<8x512xf32>
    %cst_3 = arith.constant 0.000000e+00 : f32
    %4 = vector.broadcast %cst_3 : f32 to vector<8x512xf32>
    %5 = arith.cmpf one, %1, %4 : vector<8x512xf32>
    %6 = arith.ori %3, %5 : vector<8x512xi1>
    %c0_4 = arith.constant 0 : index
    %c0_5 = arith.constant 0 : index
    %7 = vector.load %arg3[%c0_4, %c0_5] : memref<8x512xf32, #tpu.memory_space<vmem>>, vector<8x512xf32>
    %8 = arith.select %6, %0, %7 : vector<8x512xi1>, vector<8x512xf32>
    %c0_6 = arith.constant 0 : index
    %c0_7 = arith.constant 0 : index
    %9 = vector.load %arg5[%c0_6, %c0_7] : memref<8x512xf32, #tpu.memory_space<vmem>>, vector<8x512xf32>
    tpu.vector_store %arg5[%c0_6, %c0_7], %8 {strides = array<i32>} : memref<8x512xf32, #tpu.memory_space<vmem>>, vector<8x512xf32>,
    %c0_8 = arith.constant 0 : index
    %c0_9 = arith.constant 0 : index
    %10 = vector.load %arg4[%c0_8, %c0_9] : memref<8x512xf32, #tpu.memory_space<vmem>>, vector<8x512xf32>
    %11 = arith.select %6, %1, %10 : vector<8x512xi1>, vector<8x512xf32>
    %c0_10 = arith.constant 0 : index
    %c0_11 = arith.constant 0 : index
    %12 = vector.load %arg6[%c0_10, %c0_11] : memref<8x512xf32, #tpu.memory_space<vmem>>, vector<8x512xf32>
    tpu.vector_store %arg6[%c0_10, %c0_11], %11 {strides = array<i32>} : memref<8x512xf32, #tpu.memory_space<vmem>>, vector<8x512xf32>,
    return
  }
  func.func @transform_0(%arg0: i32) -> (i32, i32) {
    %c0_i32 = arith.constant 0 : i32
    %c0_i32_0 = arith.constant 0 : i32
    return %arg0, %c0_i32 : i32, i32
  }
  func.func @transform_1(%arg0: i32) -> (i32, i32) {
    %c0_i32 = arith.constant 0 : i32
    %c0_i32_0 = arith.constant 0 : i32
    return %arg0, %c0_i32 : i32, i32
  }
  func.func @transform_2(%arg0: i32) -> (i32, i32) {
    %c0_i32 = arith.constant 0 : i32
    %c0_i32_0 = arith.constant 0 : i32
    return %arg0, %c0_i32 : i32, i32
  }
  func.func @transform_3(%arg0: i32) -> (i32, i32) {
    %c0_i32 = arith.constant 0 : i32
    %c0_i32_0 = arith.constant 0 : i32
    return %arg0, %c0_i32 : i32, i32
  }
  func.func @transform_4(%arg0: i32) -> (i32, i32) {
    %c0_i32 = arith.constant 0 : i32
    %c0_i32_0 = arith.constant 0 : i32
    return %arg0, %c0_i32 : i32, i32
  }
  func.func @transform_5(%arg0: i32) -> (i32, i32) {
    %c0_i32 = arith.constant 0 : i32
    %c0_i32_0 = arith.constant 0 : i32
    return %arg0, %c0_i32 : i32, i32
  }
}

</mosaic_0001>

<llo_original>
// kernel: custom-call.1
$region0: #{custom-call.1}
  %s0 = inlined_call_operand.hbm [shape: c64[2,4,16,16], index: 0, kind: input, shape index: {}]
  %s1 = inlined_call_operand.vmem [shape: f32[2,4,16,16], index: 1, kind: output, shape index: {}]
  %s2 = scalar_lea.hbm %s0, 2048
  $region1: #{custom-call.1} parent=0
    #allocation0 [shape = 's32[1]{0}', space=sflag, size = 0x4, scoped, tag = 'scoped memory for custom-call.1']
    %3 = vsyncpa [#allocation0], 0
    %s4 = sshll.u32 %s1, 4
    %s5 = int_to_ptr.vmem [resolvable:$true] %s4
    %7 = dma.hbm_to_vmem [thread:$0]  %s2, 2048, %s5, [#allocation0]
    %8 = dma.done [#allocation0], 2048
    %9 = vsyncpa [#allocation0], 1

// kernel: custom-call
$region0: #{custom-call}
  %s0 = inlined_call_operand.hbm [shape: c64[2,4,16,16], index: 0, kind: input, shape index: {}]
  %s1 = inlined_call_operand.vmem [shape: f32[2,4,16,16], index: 1, kind: output, shape index: {}]
  $region1: #{custom-call} parent=0
    #allocation0 [shape = 's32[1]{0}', space=sflag, size = 0x4, scoped, tag = 'scoped memory for custom-call']
    %2 = vsyncpa [#allocation0], 0
    %s3 = sshll.u32 %s1, 4
    %s4 = int_to_ptr.vmem [resolvable:$true] %s3
    %6 = dma.hbm_to_vmem [thread:$0]  %s0, 2048, %s4, [#allocation0]
    %7 = dma.done [#allocation0], 2048
    %8 = vsyncpa [#allocation0], 1

// kernel: paft_dc_forward.2
$region0: #{paft_dc_forward.2}
  #allocation0 [shape = 'u32[]', space=smem, size = 0x4, offset = 0x4, fixed_abs, tag = 'smem constant byte address 0x4 - core index']
  #allocation1 [shape = 'u32[144,128]{1,0:T(1,128)}', space=vmem, size = 0x12000, scoped, tag = 'internal scratch']
  %s0 = inlined_call_operand.vmem [shape: bf16[128,128], index: 0, kind: input, shape index: {}]
  %s1 = inlined_call_operand.vmem [shape: bf16[128,128], index: 1, kind: input, shape index: {}]
  %s2 = inlined_call_operand.vmem [shape: f32[1,128], index: 2, kind: input, shape index: {}]
  %s3 = inlined_call_operand.vmem [shape: bf16[128,128], index: 3, kind: input, shape index: {}]
  %s4 = inlined_call_operand.vmem [shape: f32[1,128], index: 4, kind: input, shape index: {}]
  %s5 = inlined_call_operand.vmem [shape: bf16[128,128], index: 5, kind: input, shape index: {}]
  %s6 = inlined_call_operand.vmem [shape: f32[1,128], index: 6, kind: input, shape index: {}]
  %s7 = inlined_call_operand.vmem [shape: f32[128,128], index: 7, kind: output, shape index: {}]
  %s8 = sld [smem:[#allocation0]]
  $region61: #{paft_dc_forward.2} parent=0
    _
  %s10 = ssub.s32 1, %s8
  %s11 = scalar_select 0, %s10, %s8
  loop: start=0, step=1, limit=4
  $region2: #{paft_dc_forward.2} parent=0 // loop_pre_header
    _
  $region3: #{paft_dc_forward.2} parent=0 // loop_header
    %s13 = sphi 0, %s17
    %p14 = scmp.ge.s32.totalorder %s13, 4
    %s23 = sphi 0, %s25
    %s26 = sphi 0, %s23
    %s27 = sphi 0, %s26
    %s43 = sphi 0, %s27
    %s47 = sphi 0, %s47
    %s49 = sphi 0, %s47
    %s50 = sphi 0, %s49
    %s64 = sphi 0, %s50
    %s68 = sphi 0, %s68
    %s70 = sphi 0, %s68
    %s71 = sphi 0, %s70
    %s85 = sphi 0, %s71
    %s89 = sphi 0, %s89
    %s91 = sphi 0, %s89
    %s92 = sphi 0, %s91
    %s106 = sphi 0, %s92
    %s110 = sphi 0, %s110
    %s112 = sphi 0, %s110
    %s113 = sphi 0, %s112
    %s127 = sphi 0, %s113
    %s131 = sphi 0, %s131
    %s133 = sphi 0, %s131
    %s134 = sphi 0, %s133
    %s148 = sphi 0, %s134
    %s152 = sphi 0, %s152
    %s154 = sphi 0, %s152
    %s155 = sphi 0, %s154
    %s169 = sphi 0, %s155
    %s175 = sphi 0, %s177
    %s178 = sphi 0, %s175
    %s179 = sphi 0, %s178
    %s195 = sphi 0, %s179
  $region4: #{paft_dc_forward.2} parent=0 // loop_header_branch
    %16 = sbr.rel (%p14) target = $region8
  $region5: #{paft_dc_forward.2} parent=0 // loop_body
    %s18 = ssub.s32 %s13, 1
    %s19 = ssub.s32 %s13, 2
    %s20 = sadd.s32 %s13, 1
    %s21 = ssub.s32 %s13, %s20
    %p22 = scmp.eq.s32.totalorder %s21, 0
    %s24 = sadd.s32 %s23, 1
    %s25 = scalar_select %p22, %s23, %s24
    %p28 = pneg %p22
    %p29 = scmp.eq.s32.totalorder %s13, 1
    %p30 = por %p28, %p29
    %p31 = scmp.ne.s32.totalorder %s23, %s26
    %p32 = scmp.eq.s32.totalorder %s13, 0
    %p33 = por %p31, %p32
    %p34 = scmp.ne.s32.totalorder %s23, %s26
    %p35 = scmp.eq.s32.totalorder %s18, 1
    %p36 = por %p34, %p35
    %p37 = scmp.ne.s32.totalorder %s26, %s27
    %p38 = scmp.eq.s32.totalorder %s18, 0
    %p39 = por %p37, %p38
    %p40 = scmp.ne.s32.totalorder %s26, %s27
    %p41 = scmp.eq.s32.totalorder %s19, 1
    %p42 = por %p40, %p41
    %p44 = scmp.ne.s32.totalorder %s27, %s43
    %p45 = scmp.eq.s32.totalorder %s19, 0
    %p46 = por %p44, %p45
    %s48 = sadd.s32 %s47, 1
    %p51 = scmp.eq.s32.totalorder %s13, 1
    %p52 = scmp.ne.s32.totalorder %s47, %s49
    %p53 = scmp.eq.s32.totalorder %s13, 0
    %p54 = por %p52, %p53
    %p55 = scmp.ne.s32.totalorder %s47, %s49
    %p56 = scmp.eq.s32.totalorder %s18, 1
    %p57 = por %p55, %p56
    %p58 = scmp.ne.s32.totalorder %s49, %s50
    %p59 = scmp.eq.s32.totalorder %s18, 0
    %p60 = por %p58, %p59
    %p61 = scmp.ne.s32.totalorder %s49, %s50
    %p62 = scmp.eq.s32.totalorder %s19, 1
    %p63 = por %p61, %p62
    %p65 = scmp.ne.s32.totalorder %s50, %s64
    %p66 = scmp.eq.s32.totalorder %s19, 0
    %p67 = por %p65, %p66
    %s69 = sadd.s32 %s68, 1
    %p72 = scmp.eq.s32.totalorder %s13, 1
    %p73 = scmp.ne.s32.totalorder %s68, %s70
    %p74 = scmp.eq.s32.totalorder %s13, 0
    %p75 = por %p73, %p74
    %p76 = scmp.ne.s32.totalorder %s68, %s70
    %p77 = scmp.eq.s32.totalorder %s18, 1
    %p78 = por %p76, %p77
    %p79 = scmp.ne.s32.totalorder %s70, %s71
    %p80 = scmp.eq.s32.totalorder %s18, 0
    %p81 = por %p79, %p80
    %p82 = scmp.ne.s32.totalorder %s70, %s71
    %p83 = scmp.eq.s32.totalorder %s19, 1
    %p84 = por %p82, %p83
    %p86 = scmp.ne.s32.totalorder %s71, %s85
    %p87 = scmp.eq.s32.totalorder %s19, 0
    %p88 = por %p86, %p87
    %s90 = sadd.s32 %s89, 1
    %p93 = scmp.eq.s32.totalorder %s13, 1
    %p94 = scmp.ne.s32.totalorder %s89, %s91
    %p95 = scmp.eq.s32.totalorder %s13, 0
    %p96 = por %p94, %p95
    %p97 = scmp.ne.s32.totalorder %s89, %s91
    %p98 = scmp.eq.s32.totalorder %s18, 1
    %p99 = por %p97, %p98
    %p100 = scmp.ne.s32.totalorder %s91, %s92
    %p101 = scmp.eq.s32.totalorder %s18, 0
    %p102 = por %p100, %p101
    %p103 = scmp.ne.s32.totalorder %s91, %s92
    %p104 = scmp.eq.s32.totalorder %s19, 1
    %p105 = por %p103, %p104
    %p107 = scmp.ne.s32.totalorder %s92, %s106
    %p108 = scmp.eq.s32.totalorder %s19, 0
    %p109 = por %p107, %p108
    %s111 = sadd.s32 %s110, 1
    %p114 = scmp.eq.s32.totalorder %s13, 1
    %p115 = scmp.ne.s32.totalorder %s110, %s112
    %p116 = scmp.eq.s32.totalorder %s13, 0
    %p117 = por %p115, %p116
    %p118 = scmp.ne.s32.totalorder %s110, %s112
    %p119 = scmp.eq.s32.totalorder %s18, 1
    %p120 = por %p118, %p119
    %p121 = scmp.ne.s32.totalorder %s112, %s113
    %p122 = scmp.eq.s32.totalorder %s18, 0
    %p123 = por %p121, %p122
    %p124 = scmp.ne.s32.totalorder %s112, %s113
    %p125 = scmp.eq.s32.totalorder %s19, 1
    %p126 = por %p124, %p125
    %p128 = scmp.ne.s32.totalorder %s113, %s127
    %p129 = scmp.eq.s32.totalorder %s19, 0
    %p130 = por %p128, %p129
    %s132 = sadd.s32 %s131, 1
    %p135 = scmp.eq.s32.totalorder %s13, 1
    %p136 = scmp.ne.s32.totalorder %s131, %s133
    %p137 = scmp.eq.s32.totalorder %s13, 0
    %p138 = por %p136, %p137
    %p139 = scmp.ne.s32.totalorder %s131, %s133
    %p140 = scmp.eq.s32.totalorder %s18, 1
    %p141 = por %p139, %p140
    %p142 = scmp.ne.s32.totalorder %s133, %s134
    %p143 = scmp.eq.s32.totalorder %s18, 0
    %p144 = por %p142, %p143
    %p145 = scmp.ne.s32.totalorder %s133, %s134
    %p146 = scmp.eq.s32.totalorder %s19, 1
    %p147 = por %p145, %p146
    %p149 = scmp.ne.s32.totalorder %s134, %s148
    %p150 = scmp.eq.s32.totalorder %s19, 0
    %p151 = por %p149, %p150
    %s153 = sadd.s32 %s152, 1
    %p156 = scmp.eq.s32.totalorder %s13, 1
    %p157 = scmp.ne.s32.totalorder %s152, %s154
    %p158 = scmp.eq.s32.totalorder %s13, 0
    %p159 = por %p157, %p158
    %p160 = scmp.ne.s32.totalorder %s152, %s154
    %p161 = scmp.eq.s32.totalorder %s18, 1
    %p162 = por %p160, %p161
    %p163 = scmp.ne.s32.totalorder %s154, %s155
    %p164 = scmp.eq.s32.totalorder %s18, 0
    %p165 = por %p163, %p164
    %p166 = scmp.ne.s32.totalorder %s154, %s155
    %p167 = scmp.eq.s32.totalorder %s19, 1
    %p168 = por %p166, %p167
    %p170 = scmp.ne.s32.totalorder %s155, %s169
    %p171 = scmp.eq.s32.totalorder %s19, 0
    %p172 = por %p170, %p171
    %s173 = ssub.s32 %s13, %s20
    %p174 = scmp.eq.s32.totalorder %s173, 0
    %s176 = sadd.s32 %s175, 1
    %s177 = scalar_select %p174, %s175, %s176
    %p180 = pneg %p174
    %p181 = scmp.eq.s32.totalorder %s13, 1
    %p182 = por %p180, %p181
    %p183 = scmp.ne.s32.totalorder %s175, %s178
    %p184 = scmp.eq.s32.totalorder %s13, 0
    %p185 = por %p183, %p184
    %p186 = scmp.ne.s32.totalorder %s175, %s178
    %p187 = scmp.eq.s32.totalorder %s18, 1
    %p188 = por %p186, %p187
    %p189 = scmp.ne.s32.totalorder %s178, %s179
    %p190 = scmp.eq.s32.totalorder %s18, 0
    %p191 = por %p189, %p190
    %p192 = scmp.ne.s32.totalorder %s178, %s179
    %p193 = scmp.eq.s32.totalorder %s19, 1
    %p194 = por %p192, %p193
    %p196 = scmp.ne.s32.totalorder %s179, %s195
    %p197 = scmp.eq.s32.totalorder %s19, 0
    %p198 = por %p196, %p197
    %p199 = scmp.le.s32.totalorder 1, %s13
    %p200 = scmp.lt.s32.totalorder %s13, 3
    %p201 = pnand %p199, %p200
    %p202 = pneg %p201
    // Predicated region
    $region9: #{paft_dc_forward.2} parent=5 // pred_check
      _
    $region10: #{paft_dc_forward.2} parent=5 // pred_check_branch
      %204 = sbr.rel (%p201) target = $region12
    $region11: #{paft_dc_forward.2} parent=5 // pred_region
      %s205 = ssub.s32 %s13, 1
      // Predicated region
      $region13: #{paft_dc_forward.2} parent=11 // pred_check
        %p206 = pneg %p60
      $region14: #{paft_dc_forward.2} parent=11 // pred_check_branch
        %208 = sbr.rel (%p206) target = $region16
      $region15: #{paft_dc_forward.2} parent=11 // pred_region
        _
      $region16: #{paft_dc_forward.2} parent=11 // pred_fallthru
        _
      // Predicated region
      $region17: #{paft_dc_forward.2} parent=11 // pred_check
        %p209 = pneg %p81
      $region18: #{paft_dc_forward.2} parent=11 // pred_check_branch
        %211 = sbr.rel (%p209) target = $region20
      $region19: #{paft_dc_forward.2} parent=11 // pred_region
        _
      $region20: #{paft_dc_forward.2} parent=11 // pred_fallthru
        _
      // Predicated region
      $region21: #{paft_dc_forward.2} parent=11 // pred_check
        %p212 = pneg %p102
      $region22: #{paft_dc_forward.2} parent=11 // pred_check_branch
        %214 = sbr.rel (%p212) target = $region24
      $region23: #{paft_dc_forward.2} parent=11 // pred_region
        _
      $region24: #{paft_dc_forward.2} parent=11 // pred_fallthru
        _
      // Predicated region
      $region25: #{paft_dc_forward.2} parent=11 // pred_check
        %p215 = pneg %p123
      $region26: #{paft_dc_forward.2} parent=11 // pred_check_branch
        %217 = sbr.rel (%p215) target = $region28
      $region27: #{paft_dc_forward.2} parent=11 // pred_region
        _
      $region28: #{paft_dc_forward.2} parent=11 // pred_fallthru
        _
      // Predicated region
      $region29: #{paft_dc_forward.2} parent=11 // pred_check
        %p218 = pneg %p144
      $region30: #{paft_dc_forward.2} parent=11 // pred_check_branch
        %220 = sbr.rel (%p218) target = $region32
      $region31: #{paft_dc_forward.2} parent=11 // pred_region
        _
      $region32: #{paft_dc_forward.2} parent=11 // pred_fallthru
        _
      // Predicated region
      $region33: #{paft_dc_forward.2} parent=11 // pred_check
        %p221 = pneg %p165
      $region34: #{paft_dc_forward.2} parent=11 // pred_check_branch
        %223 = sbr.rel (%p221) target = $region36
      $region35: #{paft_dc_forward.2} parent=11 // pred_region
        _
      $region36: #{paft_dc_forward.2} parent=11 // pred_fallthru
        _
    $region12: #{paft_dc_forward.2} parent=5 // pred_fallthru
      _
    %p224 = scmp.lt.s32.totalorder %s13, 2
    // Predicated region
    $region37: #{paft_dc_forward.2} parent=5 // pred_check
      %p225 = pneg %p224
    $region38: #{paft_dc_forward.2} parent=5 // pred_check_branch
      %227 = sbr.rel (%p225) target = $region40
    $region39: #{paft_dc_forward.2} parent=5 // pred_region
      // Predicated region
      $region41: #{paft_dc_forward.2} parent=39 // pred_check
        %p228 = pneg %p33
      $region42: #{paft_dc_forward.2} parent=39 // pred_check_branch
        %230 = sbr.rel (%p228) target = $region44
      $region43: #{paft_dc_forward.2} parent=39 // pred_region
        %s231 = smul.u32 8, %s13
        %p232 = scmp.lt.s32.totalorder %s231, 15
        %s233 = scalar_select %p232, %s231, 15
        %s234 = smul.addr %s233, 4
        %s235 = scalar_lea.vmem %s0, %s234
        %s236 = smul.u32 8, %s13
      $region44: #{paft_dc_forward.2} parent=39 // pred_fallthru
        _
    $region40: #{paft_dc_forward.2} parent=5 // pred_fallthru
      _
    %p237 = scmp.le.s32.totalorder 1, %s13
    %p238 = scmp.lt.s32.totalorder %s13, 3
    %p239 = pnand %p237, %p238
    %p240 = pneg %p239
    // Predicated region
    $region45: #{paft_dc_forward.2} parent=5 // pred_check
      _
    $region46: #{paft_dc_forward.2} parent=5 // pred_check_branch
      %242 = sbr.rel (%p239) target = $region48
    $region47: #{paft_dc_forward.2} parent=5 // pred_region
      %s243 = ssub.s32 %s13, 1
      %s244 = smul.u32 8, %s18
      %p245 = scmp.lt.s32.totalorder %s244, 15
      %s246 = scalar_select %p245, %s244, 15
      %s247 = smul.addr %s246, 4
      %s248 = scalar_lea.vmem %s0, %s247
      %p249 = pneg %p39
      %p250 = pneg %p36
      %p251 = pneg %p60
      %p252 = pneg %p57
      %p253 = pneg %p81
      %p254 = pneg %p78
      %p255 = pneg %p102
      %p256 = pneg %p99
      %p257 = pneg %p123
      %p258 = pneg %p120
      %p259 = pneg %p144
      %p260 = pneg %p141
      %p261 = pneg %p165
      %p262 = pneg %p162
      %p263 = pneg %p191
      %p264 = pneg %p188
      %s265 = smul.u32 8, %s18
      %p266 = scmp.lt.s32.totalorder %s265, 15
      %s267 = scalar_select %p266, %s265, 15
      %s268 = smul.addr %s267, 8
      %s269 = scalar_lea.vmem %s7, %s268
      %s270 = smul.u32 8, %s18
      %p271 = scmp.lt.s32.totalorder %s270, 15
      %s272 = scalar_select %p271, %s270, 15
      %s273 = smul.addr %s272, 4
      %s274 = scalar_lea.vmem %s0, %s273
      %s275 = smul.u32 8, %s18
      %s276 = smul.u32 8, %s18
      %p277 = scmp.lt.s32.totalorder %s276, 15
      %s278 = scalar_select %p277, %s276, 15
      %s279 = smul.addr %s278, 8
      %s280 = scalar_lea.vmem %s7, %s279
      %s281 = smul.u32 8, %s18
      %v283 = vld [vmem:[%s274] sm:$0xf]
      %v284 = vld [vmem:[%s274 + $0x4] sm:$0xf]
      %v285 = vld [vmem:[%s274 + $0x8] sm:$0xf]
      %v286 = vld [vmem:[%s274 + $0xc] sm:$0xf]
      %v287 = vld [vmem:[%s274 + $0x10] sm:$0xf]
      %v288 = vld [vmem:[%s274 + $0x14] sm:$0xf]
      %v289 = vld [vmem:[%s274 + $0x18] sm:$0xf]
      %v290 = vld [vmem:[%s274 + $0x1c] sm:$0xf]
      %v291 = vld [vmem:[%s1] sm:$0xf]
      %v292 = vld [vmem:[%s1 + $0x4] sm:$0xf]
      %v293 = vld [vmem:[%s1 + $0x8] sm:$0xf]
      %v294 = vld [vmem:[%s1 + $0xc] sm:$0xf]
      %v295 = vld [vmem:[%s1 + $0x10] sm:$0xf]
      %v296 = vld [vmem:[%s1 + $0x14] sm:$0xf]
      %v297 = vld [vmem:[%s1 + $0x18] sm:$0xf]
      %v298 = vld [vmem:[%s1 + $0x1c] sm:$0xf]
      %v299 = vld [vmem:[%s1 + $0x20] sm:$0xf]
      %v300 = vld [vmem:[%s1 + $0x24] sm:$0xf]
      %v301 = vld [vmem:[%s1 + $0x28] sm:$0xf]
      %v302 = vld [vmem:[%s1 + $0x2c] sm:$0xf]
      %v303 = vld [vmem:[%s1 + $0x30] sm:$0xf]
      %v304 = vld [vmem:[%s1 + $0x34] sm:$0xf]
      %v305 = vld [vmem:[%s1 + $0x38] sm:$0xf]
      %v306 = vld [vmem:[%s1 + $0x3c] sm:$0xf]
      %v307 = vld [vmem:[%s2] sm:$0x1]
      %v309 = vlaneseq
      %v310 = vshrl.u32 %v309, 7
      %v311 = vsub.s32 0, %v310
      %v312 = vrot.slane %v307, %v311
      %v322 = vunpack.c.l.b16 %v283
      %v323 = vunpack.c.l.b16 %v284
      %v324 = vunpack.c.l.b16 %v285
      %v325 = vunpack.c.l.b16 %v286
      %v326 = vunpack.c.l.b16 %v287
      %v327 = vunpack.c.l.b16 %v288
      %v328 = vunpack.c.l.b16 %v289
      %v329 = vunpack.c.l.b16 %v290
      %v330 = vpack.c.b16 %v323, %v322
      %v331 = vpack.c.b16 %v325, %v324
      %v332 = vpack.c.b16 %v327, %v326
      %v333 = vpack.c.b16 %v329, %v328
      %v354 = vunpack.c.l.b16 %v291
      %v355 = vunpack.c.l.b16 %v292
      %v356 = vunpack.c.l.b16 %v293
      %v357 = vunpack.c.l.b16 %v294
      %v358 = vunpack.c.l.b16 %v295
      %v359 = vunpack.c.l.b16 %v296
      %v360 = vunpack.c.l.b16 %v297
      %v361 = vunpack.c.l.b16 %v298
      %v362 = vunpack.c.l.b16 %v299
      %v363 = vunpack.c.l.b16 %v300
      %v364 = vunpack.c.l.b16 %v301
      %v365 = vunpack.c.l.b16 %v302
      %v366 = vunpack.c.l.b16 %v303
      %v367 = vunpack.c.l.b16 %v304
      %v368 = vunpack.c.l.b16 %v305
      %v369 = vunpack.c.l.b16 %v306
      %v370 = vpack.c.b16 %v355, %v354
      %v371 = vpack.c.b16 %v357, %v356
      %v372 = vpack.c.b16 %v359, %v358
      %v373 = vpack.c.b16 %v361, %v360
      %v374 = vpack.c.b16 %v363, %v362
      %v375 = vpack.c.b16 %v365, %v364
      %v376 = vpack.c.b16 %v367, %v366
      %v377 = vpack.c.b16 %v369, %v368
      %386 = vmatprep.subr.bf16.mxu0 0
      %387 = vmatpush1.bf16.msra.mxu0 %v377
      %388 = vmatprep.subr.bf16.mxu0 0
      %389 = vmatpush1.bf16.msra.mxu0 %v376
      %390 = vmatprep.subr.bf16.mxu0 0
      %391 = vmatpush1.bf16.msra.mxu0 %v375
      %392 = vmatprep.subr.bf16.mxu0 0
      %393 = vmatpush1.bf16.msra.mxu0 %v374
      %394 = vmatprep.subr.bf16.mxu0 0
      %395 = vmatpush1.bf16.msra.mxu0 %v373
      %396 = vmatprep.subr.bf16.mxu0 0
      %397 = vmatpush1.bf16.msra.mxu0 %v372
      %398 = vmatprep.subr.bf16.mxu0 0
      %399 = vmatpush1.bf16.msra.mxu0 %v371
      %400 = vmatprep.subr.bf16.mxu0 0
      %401 = vmatpush1.bf16.msra.mxu0 %v370
      %402 = vmatprep.subr.bf16.mxu0 0
      %403 = vmatpush2.bf16.msra.mxu0 0
      %404 = vmatprep.subr.bf16.mxu0 0
      %405 = vmatpush2.bf16.msra.mxu0 0
      %406 = vmatprep.subr.bf16.mxu0 0
      %407 = vmatpush2.bf16.msra.mxu0 0
      %408 = vmatprep.subr.bf16.mxu0 0
      %409 = vmatpush2.bf16.msra.mxu0 0
      %410 = vmatprep.subr.bf16.mxu0 0
      %411 = vmatpush2.bf16.msra.mxu0 0
      %412 = vmatprep.subr.bf16.mxu0 0
      %413 = vmatpush2.bf16.msra.mxu0 0
      %414 = vmatprep.subr.bf16.mxu0 0
      %415 = vmatpush2.bf16.msra.mxu0 0
      %416 = vmatprep.subr.bf16.mxu0 0
      %417 = vmatpush2.bf16.msra.mxu0 0
      %418 = vmatprep.mubr.bf16.mxu0 0
      %419 = vmatmul.mubr.bf16.gmra.mxu0 %v330
      %v420 = vpop.f32.mrf.mxu0
      %v421 = vadd.f32 %v312, %v420
      %v422 = vpop.f32.mrf.mxu0
      %v423 = vpop.f32.mrf.mxu0
      %v424 = vadd.f32 %v312, %v423
      %v425 = vpop.f32.mrf.mxu0
      %426 = vmatprep.mubr.bf16.mxu0 0
      %427 = vmatmul.mubr.bf16.gmra.mxu0 %v331
      %v428 = vpop.f32.mrf.mxu0
      %v429 = vadd.f32 %v312, %v428
      %v430 = vpop.f32.mrf.mxu0
      %v431 = vpop.f32.mrf.mxu0
      %v432 = vadd.f32 %v312, %v431
      %v433 = vpop.f32.mrf.mxu0
      %434 = vmatprep.mubr.bf16.mxu0 0
      %435 = vmatmul.mubr.bf16.gmra.mxu0 %v332
      %v436 = vpop.f32.mrf.mxu0
      %v437 = vadd.f32 %v312, %v436
      %v438 = vpop.f32.mrf.mxu0
      %v439 = vpop.f32.mrf.mxu0
      %v440 = vadd.f32 %v312, %v439
      %v441 = vpop.f32.mrf.mxu0
      %442 = vmatprep.mubr.bf16.mxu0 0
      %443 = vmatmul.mubr.bf16.gmra.mxu0 %v333
      %v444 = vpop.f32.mrf.mxu0
      %v445 = vadd.f32 %v312, %v444
      %v446 = vpop.f32.mrf.mxu0
      %v447 = vpop.f32.mrf.mxu0
      %v448 = vadd.f32 %v312, %v447
      %v449 = vpop.f32.mrf.mxu0
      %450 = vdwg.mxu0
      %vm451 = vcmp.ge.f32.partialorder %v421, 0.0
      %vm452 = vcmp.ge.f32.partialorder %v424, 0.0
      %vm453 = vcmp.ge.f32.partialorder %v429, 0.0
      %vm454 = vcmp.ge.f32.partialorder %v432, 0.0
      %vm455 = vcmp.ge.f32.partialorder %v437, 0.0
      %vm456 = vcmp.ge.f32.partialorder %v440, 0.0
      %vm457 = vcmp.ge.f32.partialorder %v445, 0.0
      %vm458 = vcmp.ge.f32.partialorder %v448, 0.0
      %v459 = vmul.f32 %v421, 0.1
      %v460 = vmul.f32 %v424, 0.1
      %v461 = vmul.f32 %v429, 0.1
      %v462 = vmul.f32 %v432, 0.1
      %v463 = vmul.f32 %v437, 0.1
      %v464 = vmul.f32 %v440, 0.1
      %v465 = vmul.f32 %v445, 0.1
      %v466 = vmul.f32 %v448, 0.1
      %v467 = vsel %vm451, %v421, %v459
      %v468 = vsel %vm452, %v424, %v460
      %v469 = vsel %vm453, %v429, %v461
      %v470 = vsel %vm454, %v432, %v462
      %v471 = vsel %vm455, %v437, %v463
      %v472 = vsel %vm456, %v440, %v464
      %v473 = vsel %vm457, %v445, %v465
      %v474 = vsel %vm458, %v448, %v466
      %v475 = vpack.c.bf16 %v468, %v467
      %v476 = vpack.c.bf16 %v470, %v469
      %v477 = vpack.c.bf16 %v472, %v471
      %v478 = vpack.c.bf16 %v474, %v473
      %v479 = vld [vmem:[%s3] sm:$0xf]
      %v480 = vld [vmem:[%s3 + $0x4] sm:$0xf]
      %v481 = vld [vmem:[%s3 + $0x8] sm:$0xf]
      %v482 = vld [vmem:[%s3 + $0xc] sm:$0xf]
      %v483 = vld [vmem:[%s3 + $0x10] sm:$0xf]
      %v484 = vld [vmem:[%s3 + $0x14] sm:$0xf]
      %v485 = vld [vmem:[%s3 + $0x18] sm:$0xf]
      %v486 = vld [vmem:[%s3 + $0x1c] sm:$0xf]
      %v487 = vld [vmem:[%s3 + $0x20] sm:$0xf]
      %v488 = vld [vmem:[%s3 + $0x24] sm:$0xf]
      %v489 = vld [vmem:[%s3 + $0x28] sm:$0xf]
      %v490 = vld [vmem:[%s3 + $0x2c] sm:$0xf]
      %v491 = vld [vmem:[%s3 + $0x30] sm:$0xf]
      %v492 = vld [vmem:[%s3 + $0x34] sm:$0xf]
      %v493 = vld [vmem:[%s3 + $0x38] sm:$0xf]
      %v494 = vld [vmem:[%s3 + $0x3c] sm:$0xf]
      %v495 = vld [vmem:[%s4] sm:$0x1]
      %v497 = vlaneseq
      %v498 = vshrl.u32 %v497, 7
      %v499 = vsub.s32 0, %v498
      %v500 = vrot.slane %v495, %v499
      %v518 = vunpack.c.l.b16 %v479
      %v519 = vunpack.c.l.b16 %v480
      %v520 = vunpack.c.l.b16 %v481
      %v521 = vunpack.c.l.b16 %v482
      %v522 = vunpack.c.l.b16 %v483
      %v523 = vunpack.c.l.b16 %v484
      %v524 = vunpack.c.l.b16 %v485
      %v525 = vunpack.c.l.b16 %v486
      %v526 = vunpack.c.l.b16 %v487
      %v527 = vunpack.c.l.b16 %v488
      %v528 = vunpack.c.l.b16 %v489
      %v529 = vunpack.c.l.b16 %v490
      %v530 = vunpack.c.l.b16 %v491
      %v531 = vunpack.c.l.b16 %v492
      %v532 = vunpack.c.l.b16 %v493
      %v533 = vunpack.c.l.b16 %v494
      %v534 = vpack.c.b16 %v519, %v518
      %v535 = vpack.c.b16 %v521, %v520
      %v536 = vpack.c.b16 %v523, %v522
      %v537 = vpack.c.b16 %v525, %v524
      %v538 = vpack.c.b16 %v527, %v526
      %v539 = vpack.c.b16 %v529, %v528
      %v540 = vpack.c.b16 %v531, %v530
      %v541 = vpack.c.b16 %v533, %v532
      %550 = vmatprep.subr.bf16.mxu0 0
      %551 = vmatpush1.bf16.msra.mxu0 %v541
      %552 = vmatprep.subr.bf16.mxu0 0
      %553 = vmatpush1.bf16.msra.mxu0 %v540
      %554 = vmatprep.subr.bf16.mxu0 0
      %555 = vmatpush1.bf16.msra.mxu0 %v539
      %556 = vmatprep.subr.bf16.mxu0 0
      %557 = vmatpush1.bf16.msra.mxu0 %v538
      %558 = vmatprep.subr.bf16.mxu0 0
      %559 = vmatpush1.bf16.msra.mxu0 %v537
      %560 = vmatprep.subr.bf16.mxu0 0
      %561 = vmatpush1.bf16.msra.mxu0 %v536
      %562 = vmatprep.subr.bf16.mxu0 0
      %563 = vmatpush1.bf16.msra.mxu0 %v535
      %564 = vmatprep.subr.bf16.mxu0 0
      %565 = vmatpush1.bf16.msra.mxu0 %v534
      %566 = vmatprep.subr.bf16.mxu0 0
      %567 = vmatpush2.bf16.msra.mxu0 0
      %568 = vmatprep.subr.bf16.mxu0 0
      %569 = vmatpush2.bf16.msra.mxu0 0
      %570 = vmatprep.subr.bf16.mxu0 0
      %571 = vmatpush2.bf16.msra.mxu0 0
      %572 = vmatprep.subr.bf16.mxu0 0
      %573 = vmatpush2.bf16.msra.mxu0 0
      %574 = vmatprep.subr.bf16.mxu0 0
      %575 = vmatpush2.bf16.msra.mxu0 0
      %576 = vmatprep.subr.bf16.mxu0 0
      %577 = vmatpush2.bf16.msra.mxu0 0
      %578 = vmatprep.subr.bf16.mxu0 0
      %579 = vmatpush2.bf16.msra.mxu0 0
      %580 = vmatprep.subr.bf16.mxu0 0
      %581 = vmatpush2.bf16.msra.mxu0 0
      %582 = vmatprep.mubr.bf16.mxu0 0
      %583 = vmatmul.mubr.bf16.gmra.mxu0 %v475
      %v584 = vpop.f32.mrf.mxu0
      %v585 = vadd.f32 %v500, %v584
      %v586 = vpop.f32.mrf.mxu0
      %v587 = vpop.f32.mrf.mxu0
      %v588 = vadd.f32 %v500, %v587
      %v589 = vpop.f32.mrf.mxu0
      %590 = vmatprep.mubr.bf16.mxu0 0
      %591 = vmatmul.mubr.bf16.gmra.mxu0 %v476
      %v592 = vpop.f32.mrf.mxu0
      %v593 = vadd.f32 %v500, %v592
      %v594 = vpop.f32.mrf.mxu0
      %v595 = vpop.f32.mrf.mxu0
      %v596 = vadd.f32 %v500, %v595
      %v597 = vpop.f32.mrf.mxu0
      %598 = vmatprep.mubr.bf16.mxu0 0
      %599 = vmatmul.mubr.bf16.gmra.mxu0 %v477
      %v600 = vpop.f32.mrf.mxu0
      %v601 = vadd.f32 %v500, %v600
      %v602 = vpop.f32.mrf.mxu0
      %v603 = vpop.f32.mrf.mxu0
      %v604 = vadd.f32 %v500, %v603
      %v605 = vpop.f32.mrf.mxu0
      %606 = vmatprep.mubr.bf16.mxu0 0
      %607 = vmatmul.mubr.bf16.gmra.mxu0 %v478
      %v608 = vpop.f32.mrf.mxu0
      %v609 = vadd.f32 %v500, %v608
      %v610 = vpop.f32.mrf.mxu0
      %v611 = vpop.f32.mrf.mxu0
      %v612 = vadd.f32 %v500, %v611
      %v613 = vpop.f32.mrf.mxu0
      %614 = vdwg.mxu0
      %vm615 = vcmp.ge.f32.partialorder %v585, 0.0
      %vm616 = vcmp.ge.f32.partialorder %v588, 0.0
      %vm617 = vcmp.ge.f32.partialorder %v593, 0.0
      %vm618 = vcmp.ge.f32.partialorder %v596, 0.0
      %vm619 = vcmp.ge.f32.partialorder %v601, 0.0
      %vm620 = vcmp.ge.f32.partialorder %v604, 0.0
      %vm621 = vcmp.ge.f32.partialorder %v609, 0.0
      %vm622 = vcmp.ge.f32.partialorder %v612, 0.0
      %v623 = vmul.f32 %v585, 0.1
      %v624 = vmul.f32 %v588, 0.1
      %v625 = vmul.f32 %v593, 0.1
      %v626 = vmul.f32 %v596, 0.1
      %v627 = vmul.f32 %v601, 0.1
      %v628 = vmul.f32 %v604, 0.1
      %v629 = vmul.f32 %v609, 0.1
      %v630 = vmul.f32 %v612, 0.1
      %v631 = vsel %vm615, %v585, %v623
      %v632 = vsel %vm616, %v588, %v624
      %v633 = vsel %vm617, %v593, %v625
      %v634 = vsel %vm618, %v596, %v626
      %v635 = vsel %vm619, %v601, %v627
      %v636 = vsel %vm620, %v604, %v628
      %v637 = vsel %vm621, %v609, %v629
      %v638 = vsel %vm622, %v612, %v630
      %v639 = vpack.c.bf16 %v632, %v631
      %v640 = vpack.c.bf16 %v634, %v633
      %v641 = vpack.c.bf16 %v636, %v635
      %v642 = vpack.c.bf16 %v638, %v637
      %v643 = vld [vmem:[%s5] sm:$0xf]
      %v644 = vld [vmem:[%s5 + $0x4] sm:$0xf]
      %v645 = vld [vmem:[%s5 + $0x8] sm:$0xf]
      %v646 = vld [vmem:[%s5 + $0xc] sm:$0xf]
      %v647 = vld [vmem:[%s5 + $0x10] sm:$0xf]
      %v648 = vld [vmem:[%s5 + $0x14] sm:$0xf]
      %v649 = vld [vmem:[%s5 + $0x18] sm:$0xf]
      %v650 = vld [vmem:[%s5 + $0x1c] sm:$0xf]
      %v651 = vld [vmem:[%s5 + $0x20] sm:$0xf]
      %v652 = vld [vmem:[%s5 + $0x24] sm:$0xf]
      %v653 = vld [vmem:[%s5 + $0x28] sm:$0xf]
      %v654 = vld [vmem:[%s5 + $0x2c] sm:$0xf]
      %v655 = vld [vmem:[%s5 + $0x30] sm:$0xf]
      %v656 = vld [vmem:[%s5 + $0x34] sm:$0xf]
      %v657 = vld [vmem:[%s5 + $0x38] sm:$0xf]
      %v658 = vld [vmem:[%s5 + $0x3c] sm:$0xf]
      %v659 = vld [vmem:[%s6] sm:$0x1]
      %v661 = vlaneseq
      %v662 = vshrl.u32 %v661, 7
      %v663 = vsub.s32 0, %v662
      %v664 = vrot.slane %v659, %v663
      %v682 = vunpack.c.l.b16 %v643
      %v683 = vunpack.c.l.b16 %v644
      %v684 = vunpack.c.l.b16 %v645
      %v685 = vunpack.c.l.b16 %v646
      %v686 = vunpack.c.l.b16 %v647
      %v687 = vunpack.c.l.b16 %v648
      %v688 = vunpack.c.l.b16 %v649
      %v689 = vunpack.c.l.b16 %v650
      %v690 = vunpack.c.l.b16 %v651
      %v691 = vunpack.c.l.b16 %v652
      %v692 = vunpack.c.l.b16 %v653
      %v693 = vunpack.c.l.b16 %v654
      %v694 = vunpack.c.l.b16 %v655
      %v695 = vunpack.c.l.b16 %v656
      %v696 = vunpack.c.l.b16 %v657
      %v697 = vunpack.c.l.b16 %v658
      %v698 = vpack.c.b16 %v683, %v682
      %v699 = vpack.c.b16 %v685, %v684
      %v700 = vpack.c.b16 %v687, %v686
      %v701 = vpack.c.b16 %v689, %v688
      %v702 = vpack.c.b16 %v691, %v690
      %v703 = vpack.c.b16 %v693, %v692
      %v704 = vpack.c.b16 %v695, %v694
      %v705 = vpack.c.b16 %v697, %v696
      %714 = vmatprep.subr.bf16.mxu0 0
      %715 = vmatpush1.bf16.msra.mxu0 %v705
      %716 = vmatprep.subr.bf16.mxu0 0
      %717 = vmatpush1.bf16.msra.mxu0 %v704
      %718 = vmatprep.subr.bf16.mxu0 0
      %719 = vmatpush1.bf16.msra.mxu0 %v703
      %720 = vmatprep.subr.bf16.mxu0 0
      %721 = vmatpush1.bf16.msra.mxu0 %v702
      %722 = vmatprep.subr.bf16.mxu0 0
      %723 = vmatpush1.bf16.msra.mxu0 %v701
      %724 = vmatprep.subr.bf16.mxu0 0
      %725 = vmatpush1.bf16.msra.mxu0 %v700
      %726 = vmatprep.subr.bf16.mxu0 0
      %727 = vmatpush1.bf16.msra.mxu0 %v699
      %728 = vmatprep.subr.bf16.mxu0 0
      %729 = vmatpush1.bf16.msra.mxu0 %v698
      %730 = vmatprep.subr.bf16.mxu0 0
      %731 = vmatpush2.bf16.msra.mxu0 0
      %732 = vmatprep.subr.bf16.mxu0 0
      %733 = vmatpush2.bf16.msra.mxu0 0
      %734 = vmatprep.subr.bf16.mxu0 0
      %735 = vmatpush2.bf16.msra.mxu0 0
      %736 = vmatprep.subr.bf16.mxu0 0
      %737 = vmatpush2.bf16.msra.mxu0 0
      %738 = vmatprep.subr.bf16.mxu0 0
      %739 = vmatpush2.bf16.msra.mxu0 0
      %740 = vmatprep.subr.bf16.mxu0 0
      %741 = vmatpush2.bf16.msra.mxu0 0
      %742 = vmatprep.subr.bf16.mxu0 0
      %743 = vmatpush2.bf16.msra.mxu0 0
      %744 = vmatprep.subr.bf16.mxu0 0
      %745 = vmatpush2.bf16.msra.mxu0 0
      %746 = vmatprep.mubr.bf16.mxu0 0
      %747 = vmatmul.mubr.bf16.gmra.mxu0 %v639
      %v748 = vpop.f32.mrf.mxu0
      %v749 = vadd.f32 %v664, %v748
      %v750 = vpop.f32.mrf.mxu0
      %v751 = vpop.f32.mrf.mxu0
      %v752 = vadd.f32 %v664, %v751
      %v753 = vpop.f32.mrf.mxu0
      %754 = vmatprep.mubr.bf16.mxu0 0
      %755 = vmatmul.mubr.bf16.gmra.mxu0 %v640
      %v756 = vpop.f32.mrf.mxu0
      %v757 = vadd.f32 %v664, %v756
      %v758 = vpop.f32.mrf.mxu0
      %v759 = vpop.f32.mrf.mxu0
      %v760 = vadd.f32 %v664, %v759
      %v761 = vpop.f32.mrf.mxu0
      %762 = vmatprep.mubr.bf16.mxu0 0
      %763 = vmatmul.mubr.bf16.gmra.mxu0 %v641
      %v764 = vpop.f32.mrf.mxu0
      %v765 = vadd.f32 %v664, %v764
      %v766 = vpop.f32.mrf.mxu0
      %v767 = vpop.f32.mrf.mxu0
      %v768 = vadd.f32 %v664, %v767
      %v769 = vpop.f32.mrf.mxu0
      %770 = vmatprep.mubr.bf16.mxu0 0
      %771 = vmatmul.mubr.bf16.gmra.mxu0 %v642
      %v772 = vpop.f32.mrf.mxu0
      %v773 = vadd.f32 %v664, %v772
      %v774 = vpop.f32.mrf.mxu0
      %v775 = vpop.f32.mrf.mxu0
      %v776 = vadd.f32 %v664, %v775
      %v777 = vpop.f32.mrf.mxu0
      %778 = vdwg.mxu0
      %779 = vst [vmem:[%s280] sm:$0xff] %v749
      %780 = vst [vmem:[%s280 + $0x8] sm:$0xff] %v752
      %781 = vst [vmem:[%s280 + $0x10] sm:$0xff] %v757
      %782 = vst [vmem:[%s280 + $0x18] sm:$0xff] %v760
      %783 = vst [vmem:[%s280 + $0x20] sm:$0xff] %v765
      %784 = vst [vmem:[%s280 + $0x28] sm:$0xff] %v768
      %785 = vst [vmem:[%s280 + $0x30] sm:$0xff] %v773
      %786 = vst [vmem:[%s280 + $0x38] sm:$0xff] %v776
      %s787 = smul.u32 8, %s18
      %p788 = scmp.lt.s32.totalorder %s787, 15
      %s789 = scalar_select %p788, %s787, 15
      %s790 = smul.addr %s789, 8
      %s791 = scalar_lea.vmem %s7, %s790
      // Predicated region
      $region49: #{paft_dc_forward.2} parent=47 // pred_check
        %p792 = pneg %p188
      $region50: #{paft_dc_forward.2} parent=47 // pred_check_branch
        %794 = sbr.rel (%p792) target = $region52
      $region51: #{paft_dc_forward.2} parent=47 // pred_region
        %s795 = smul.u32 8, %s18
      $region52: #{paft_dc_forward.2} parent=47 // pred_fallthru
        _
    $region48: #{paft_dc_forward.2} parent=5 // pred_fallthru
      _
    %p796 = scmp.le.s32.totalorder 2, %s13
    // Predicated region
    $region53: #{paft_dc_forward.2} parent=5 // pred_check
      %p797 = pneg %p796
    $region54: #{paft_dc_forward.2} parent=5 // pred_check_branch
      %799 = sbr.rel (%p797) target = $region56
    $region55: #{paft_dc_forward.2} parent=5 // pred_region
      %s800 = ssub.s32 %s13, 2
      // Predicated region
      $region57: #{paft_dc_forward.2} parent=55 // pred_check
        %p801 = pneg %p194
      $region58: #{paft_dc_forward.2} parent=55 // pred_check_branch
        %803 = sbr.rel (%p801) target = $region60
      $region59: #{paft_dc_forward.2} parent=55 // pred_region
        %s804 = smul.u32 8, %s19
        %p805 = scmp.lt.s32.totalorder %s804, 15
        %s806 = scalar_select %p805, %s804, 15
        %s807 = smul.addr %s806, 8
        %s808 = scalar_lea.vmem %s7, %s807
      $region60: #{paft_dc_forward.2} parent=55 // pred_fallthru
        _
    $region56: #{paft_dc_forward.2} parent=5 // pred_fallthru
      _
  $region6: #{paft_dc_forward.2} parent=0 // loop_footer
    %s17 = sadd.s32 1, %s13
  $region7: #{paft_dc_forward.2} parent=0 // loop_footer_branch
    %12 = sbr.rel target = $region3
  $region8: #{paft_dc_forward.2} parent=0 // loop_exit
    _

// kernel: paft_dc_forward.3
$region0: #{paft_dc_forward.3}
  #allocation0 [shape = 'u32[]', space=smem, size = 0x4, offset = 0x4, fixed_abs, tag = 'smem constant byte address 0x4 - core index']
  #allocation1 [shape = 'u32[144,128]{1,0:T(1,128)}', space=vmem, size = 0x12000, scoped, tag = 'internal scratch']
  %s0 = inlined_call_operand.vmem [shape: f32[8,512], index: 0, kind: input, shape index: {}]
  %s1 = inlined_call_operand.vmem [shape: f32[8,512], index: 1, kind: input, shape index: {}]
  %s2 = inlined_call_operand.vmem [shape: f32[8,512], index: 2, kind: input, shape index: {}]
  %s3 = inlined_call_operand.vmem [shape: f32[8,512], index: 3, kind: input, shape index: {}]
  %s4 = inlined_call_operand.vmem [shape: f32[8,512], index: 4, kind: output, shape index: {0}]
  %s5 = inlined_call_operand.vmem [shape: f32[8,512], index: 5, kind: output, shape index: {1}]
  %6 = xla_tuple %s4, %s5
  %s7 = sld [smem:[#allocation0]]
  $region34: #{paft_dc_forward.3} parent=0
    _
  %s9 = ssub.s32 1, %s7
  %s10 = scalar_select 0, %s9, %s7
  // Predicated region
  $region2: #{paft_dc_forward.3} parent=0 // pred_check
    _
  $region3: #{paft_dc_forward.3} parent=0 // pred_check_branch
    %12 = sbr.rel (0) target = $region5
  $region4: #{paft_dc_forward.3} parent=0 // pred_region
    _
  $region5: #{paft_dc_forward.3} parent=0 // pred_fallthru
    _
  // Predicated region
  $region6: #{paft_dc_forward.3} parent=0 // pred_check
    _
  $region7: #{paft_dc_forward.3} parent=0 // pred_check_branch
    %14 = sbr.rel (0) target = $region9
  $region8: #{paft_dc_forward.3} parent=0 // pred_region
    _
  $region9: #{paft_dc_forward.3} parent=0 // pred_fallthru
    _
  // Predicated region
  $region10: #{paft_dc_forward.3} parent=0 // pred_check
    _
  $region11: #{paft_dc_forward.3} parent=0 // pred_check_branch
    %16 = sbr.rel (0) target = $region13
  $region12: #{paft_dc_forward.3} parent=0 // pred_region
    _
  $region13: #{paft_dc_forward.3} parent=0 // pred_fallthru
    _
  // Predicated region
  $region14: #{paft_dc_forward.3} parent=0 // pred_check
    _
  $region15: #{paft_dc_forward.3} parent=0 // pred_check_branch
    %18 = sbr.rel (0) target = $region17
  $region16: #{paft_dc_forward.3} parent=0 // pred_region
    _
  $region17: #{paft_dc_forward.3} parent=0 // pred_fallthru
    _
  %v19 = vld [vmem:[%s0] sm:$0xff]
  %v20 = vld [vmem:[%s0 + $0x8] sm:$0xff]
  %v21 = vld [vmem:[%s0 + $0x10] sm:$0xff]
  %v22 = vld [vmem:[%s0 + $0x18] sm:$0xff]
  %v23 = vld [vmem:[%s1] sm:$0xff]
  %v24 = vld [vmem:[%s1 + $0x8] sm:$0xff]
  %v25 = vld [vmem:[%s1 + $0x10] sm:$0xff]
  %v26 = vld [vmem:[%s1 + $0x18] sm:$0xff]
  %vm27 = vcmp.ne.f32.partialorder %v19, 0.0
  %vm28 = vcmp.ne.f32.partialorder %v20, 0.0
  %vm29 = vcmp.ne.f32.partialorder %v21, 0.0
  %vm30 = vcmp.ne.f32.partialorder %v22, 0.0
  %vm31 = vcmp.ne.f32.partialorder %v23, 0.0
  %vm32 = vcmp.ne.f32.partialorder %v24, 0.0
  %vm33 = vcmp.ne.f32.partialorder %v25, 0.0
  %vm34 = vcmp.ne.f32.partialorder %v26, 0.0
  %vm35 = vmor %vm27, %vm31
  %vm36 = vmor %vm28, %vm32
  %vm37 = vmor %vm29, %vm33
  %vm38 = vmor %vm30, %vm34
  %v39 = vld [vmem:[%s2] sm:$0xff]
  %v40 = vld [vmem:[%s2 + $0x8] sm:$0xff]
  %v41 = vld [vmem:[%s2 + $0x10] sm:$0xff]
  %v42 = vld [vmem:[%s2 + $0x18] sm:$0xff]
  %v43 = vsel %vm35, %v19, %v39
  %v44 = vsel %vm36, %v20, %v40
  %v45 = vsel %vm37, %v21, %v41
  %v46 = vsel %vm38, %v22, %v42
  %47 = vst [vmem:[%s4] sm:$0xff] %v43
  %48 = vst [vmem:[%s4 + $0x8] sm:$0xff] %v44
  %49 = vst [vmem:[%s4 + $0x10] sm:$0xff] %v45
  %50 = vst [vmem:[%s4 + $0x18] sm:$0xff] %v46
  %v51 = vld [vmem:[%s3] sm:$0xff]
  %v52 = vld [vmem:[%s3 + $0x8] sm:$0xff]
  %v53 = vld [vmem:[%s3 + $0x10] sm:$0xff]
  %v54 = vld [vmem:[%s3 + $0x18] sm:$0xff]
  %v55 = vsel %vm35, %v23, %v51
  %v56 = vsel %vm36, %v24, %v52
  %v57 = vsel %vm37, %v25, %v53
  %v58 = vsel %vm38, %v26, %v54
  %59 = vst [vmem:[%s5] sm:$0xff] %v55
  %60 = vst [vmem:[%s5 + $0x8] sm:$0xff] %v56
  %61 = vst [vmem:[%s5 + $0x10] sm:$0xff] %v57
  %62 = vst [vmem:[%s5 + $0x18] sm:$0xff] %v58
  // Predicated region
  $region18: #{paft_dc_forward.3} parent=0 // pred_check
    _
  $region19: #{paft_dc_forward.3} parent=0 // pred_check_branch
    %64 = sbr.rel (0) target = $region21
  $region20: #{paft_dc_forward.3} parent=0 // pred_region
    _
  $region21: #{paft_dc_forward.3} parent=0 // pred_fallthru
    _
  // Predicated region
  $region22: #{paft_dc_forward.3} parent=0 // pred_check
    _
  $region23: #{paft_dc_forward.3} parent=0 // pred_check_branch
    %66 = sbr.rel (0) target = $region25
  $region24: #{paft_dc_forward.3} parent=0 // pred_region
    _
  $region25: #{paft_dc_forward.3} parent=0 // pred_fallthru
    _
  // Predicated region
  $region26: #{paft_dc_forward.3} parent=0 // pred_check
    _
  $region27: #{paft_dc_forward.3} parent=0 // pred_check_branch
    %68 = sbr.rel (0) target = $region29
  $region28: #{paft_dc_forward.3} parent=0 // pred_region
    _
  $region29: #{paft_dc_forward.3} parent=0 // pred_fallthru
    _
  // Predicated region
  $region30: #{paft_dc_forward.3} parent=0 // pred_check
    _
  $region31: #{paft_dc_forward.3} parent=0 // pred_check_branch
    %70 = sbr.rel (0) target = $region33
  $region32: #{paft_dc_forward.3} parent=0 // pred_region
    _
  $region33: #{paft_dc_forward.3} parent=0 // pred_fallthru
    _

// kernel: custom-call.2
$region0: #{custom-call.2}
  %s0 = inlined_call_operand.vmem [shape: f32[2,4,16,16], index: 0, kind: input, shape index: {}]
  %s1 = inlined_call_operand.vmem [shape: f32[2,4,16,16], index: 1, kind: input, shape index: {}]
  %s2 = inlined_call_operand.vmem [shape: c64[2,4,16,16], index: 2, kind: output, shape index: {}]
  %s4 = scalar_lea.vmem %s2, 128
  %v5 = vld [vmem:[%s0] sm:$0xff]
  %6 = vst [vmem:[%s2] sm:$0xff] %v5
  %s7 = scalar_lea.vmem %s2, 8
  %s8 = scalar_lea.vmem %s0, 8
  %v9 = vld [vmem:[%s8] sm:$0xff]
  %10 = vst [vmem:[%s7] sm:$0xff] %v9
  %s11 = scalar_lea.vmem %s2, 16
  %s12 = scalar_lea.vmem %s0, 16
  %v13 = vld [vmem:[%s12] sm:$0xff]
  %14 = vst [vmem:[%s11] sm:$0xff] %v13
  %s15 = scalar_lea.vmem %s2, 24
  %s16 = scalar_lea.vmem %s0, 24
  %v17 = vld [vmem:[%s16] sm:$0xff]
  %18 = vst [vmem:[%s15] sm:$0xff] %v17
  %s19 = scalar_lea.vmem %s2, 32
  %s20 = scalar_lea.vmem %s0, 32
  %v21 = vld [vmem:[%s20] sm:$0xff]
  %22 = vst [vmem:[%s19] sm:$0xff] %v21
  %s23 = scalar_lea.vmem %s2, 40
  %s24 = scalar_lea.vmem %s0, 40
  %v25 = vld [vmem:[%s24] sm:$0xff]
  %26 = vst [vmem:[%s23] sm:$0xff] %v25
  %s27 = scalar_lea.vmem %s2, 48
  %s28 = scalar_lea.vmem %s0, 48
  %v29 = vld [vmem:[%s28] sm:$0xff]
  %30 = vst [vmem:[%s27] sm:$0xff] %v29
  %s31 = scalar_lea.vmem %s2, 56
  %s32 = scalar_lea.vmem %s0, 56
  %v33 = vld [vmem:[%s32] sm:$0xff]
  %34 = vst [vmem:[%s31] sm:$0xff] %v33
  %s35 = scalar_lea.vmem %s2, 64
  %s36 = scalar_lea.vmem %s0, 64
  %v37 = vld [vmem:[%s36] sm:$0xff]
  %38 = vst [vmem:[%s35] sm:$0xff] %v37
  %s39 = scalar_lea.vmem %s2, 72
  %s40 = scalar_lea.vmem %s0, 72
  %v41 = vld [vmem:[%s40] sm:$0xff]
  %42 = vst [vmem:[%s39] sm:$0xff] %v41
  %s43 = scalar_lea.vmem %s2, 80
  %s44 = scalar_lea.vmem %s0, 80
  %v45 = vld [vmem:[%s44] sm:$0xff]
  %46 = vst [vmem:[%s43] sm:$0xff] %v45
  %s47 = scalar_lea.vmem %s2, 88
  %s48 = scalar_lea.vmem %s0, 88
  %v49 = vld [vmem:[%s48] sm:$0xff]
  %50 = vst [vmem:[%s47] sm:$0xff] %v49
  %s51 = scalar_lea.vmem %s2, 96
  %s52 = scalar_lea.vmem %s0, 96
  %v53 = vld [vmem:[%s52] sm:$0xff]
  %54 = vst [vmem:[%s51] sm:$0xff] %v53
  %s55 = scalar_lea.vmem %s2, 104
  %s56 = scalar_lea.vmem %s0, 104
  %v57 = vld [vmem:[%s56] sm:$0xff]
  %58 = vst [vmem:[%s55] sm:$0xff] %v57
  %s59 = scalar_lea.vmem %s2, 112
  %s60 = scalar_lea.vmem %s0, 112
  %v61 = vld [vmem:[%s60] sm:$0xff]
  %62 = vst [vmem:[%s59] sm:$0xff] %v61
  %s63 = scalar_lea.vmem %s2, 120
  %s64 = scalar_lea.vmem %s0, 120
  %v65 = vld [vmem:[%s64] sm:$0xff]
  %66 = vst [vmem:[%s63] sm:$0xff] %v65
  %v67 = vld [vmem:[%s1] sm:$0xff]
  %68 = vst [vmem:[%s4] sm:$0xff] %v67
  %s69 = scalar_lea.vmem %s4, 8
  %s70 = scalar_lea.vmem %s1, 8
  %v71 = vld [vmem:[%s70] sm:$0xff]
  %72 = vst [vmem:[%s69] sm:$0xff] %v71
  %s73 = scalar_lea.vmem %s4, 16
  %s74 = scalar_lea.vmem %s1, 16
  %v75 = vld [vmem:[%s74] sm:$0xff]
  %76 = vst [vmem:[%s73] sm:$0xff] %v75
  %s77 = scalar_lea.vmem %s4, 24
  %s78 = scalar_lea.vmem %s1, 24
  %v79 = vld [vmem:[%s78] sm:$0xff]
  %80 = vst [vmem:[%s77] sm:$0xff] %v79
  %s81 = scalar_lea.vmem %s4, 32
  %s82 = scalar_lea.vmem %s1, 32
  %v83 = vld [vmem:[%s82] sm:$0xff]
  %84 = vst [vmem:[%s81] sm:$0xff] %v83
  %s85 = scalar_lea.vmem %s4, 40
  %s86 = scalar_lea.vmem %s1, 40
  %v87 = vld [vmem:[%s86] sm:$0xff]
  %88 = vst [vmem:[%s85] sm:$0xff] %v87
  %s89 = scalar_lea.vmem %s4, 48
  %s90 = scalar_lea.vmem %s1, 48
  %v91 = vld [vmem:[%s90] sm:$0xff]
  %92 = vst [vmem:[%s89] sm:$0xff] %v91
  %s93 = scalar_lea.vmem %s4, 56
  %s94 = scalar_lea.vmem %s1, 56
  %v95 = vld [vmem:[%s94] sm:$0xff]
  %96 = vst [vmem:[%s93] sm:$0xff] %v95
  %s97 = scalar_lea.vmem %s4, 64
  %s98 = scalar_lea.vmem %s1, 64
  %v99 = vld [vmem:[%s98] sm:$0xff]
  %100 = vst [vmem:[%s97] sm:$0xff] %v99
  %s101 = scalar_lea.vmem %s4, 72
  %s102 = scalar_lea.vmem %s1, 72
  %v103 = vld [vmem:[%s102] sm:$0xff]
  %104 = vst [vmem:[%s101] sm:$0xff] %v103
  %s105 = scalar_lea.vmem %s4, 80
  %s106 = scalar_lea.vmem %s1, 80
  %v107 = vld [vmem:[%s106] sm:$0xff]
  %108 = vst [vmem:[%s105] sm:$0xff] %v107
  %s109 = scalar_lea.vmem %s4, 88
  %s110 = scalar_lea.vmem %s1, 88
  %v111 = vld [vmem:[%s110] sm:$0xff]
  %112 = vst [vmem:[%s109] sm:$0xff] %v111
  %s113 = scalar_lea.vmem %s4, 96
  %s114 = scalar_lea.vmem %s1, 96
  %v115 = vld [vmem:[%s114] sm:$0xff]
  %116 = vst [vmem:[%s113] sm:$0xff] %v115
  %s117 = scalar_lea.vmem %s4, 104
  %s118 = scalar_lea.vmem %s1, 104
  %v119 = vld [vmem:[%s118] sm:$0xff]
  %120 = vst [vmem:[%s117] sm:$0xff] %v119
  %s121 = scalar_lea.vmem %s4, 112
  %s122 = scalar_lea.vmem %s1, 112
  %v123 = vld [vmem:[%s122] sm:$0xff]
  %124 = vst [vmem:[%s121] sm:$0xff] %v123
  %s125 = scalar_lea.vmem %s4, 120
  %s126 = scalar_lea.vmem %s1, 120
  %v127 = vld [vmem:[%s126] sm:$0xff]
  %128 = vst [vmem:[%s125] sm:$0xff] %v127

</llo_original>
